<compile_context>
chip_gen: v6e
topology: v6e:2x2x1
jax: 0.10.0
libtpu: 0.0.40
codegen_flags: <defaults>
</compile_context>

<pallas_src>
import jax
import jax.numpy as jnp
from jax import lax
from jax.experimental import pallas as pl
from jax.experimental.pallas import tpu as pltpu


def _pointwise_conv_kernel(x_ref, w_ref, b_ref, o_ref):
    # x_ref: (1, C_in_eff, TS)   input tile, spatial flattened into lanes
    # w_ref: (C_out, C_in_eff)   1x1x1 (or im2col-folded) conv weight
    # b_ref: (C_out, 1)          conv bias (f32)
    # o_ref: (1, C_out, TS)
    y = jnp.dot(w_ref[...], x_ref[0], preferred_element_type=jnp.float32)
    o_ref[0] = (y + b_ref[...]).astype(o_ref.dtype)


def _choose_spatial_tile(s, c_in, c_out, itemsize, target_bytes=2 * 1024 * 1024):
    """Lane-tile width: multiple of 128, largest per-buffer tile kept <= target_bytes."""
    c = max(c_in, c_out, 1)
    lanes = max(128, (target_bytes // (c * itemsize)) // 128 * 128)
    return int(min(lanes, pl.cdiv(s, 128) * 128))


def _pointwise_conv(x_flat, w2d, b, out_dtype):
    """x_flat: (N, C_in_eff, S); w2d: (C_out, C_in_eff); b: (C_out,) -> (N, C_out, S)."""
    n, c_in, s = x_flat.shape
    c_out = w2d.shape[0]
    itemsize = jnp.dtype(x_flat.dtype).itemsize

    ts = _choose_spatial_tile(s, c_in, c_out, itemsize)
    pad = (-s) % ts
    if pad:
        # pad lanes so every store is lane-dense / unmasked; padded columns are sliced off.
        x_flat = jnp.pad(x_flat, ((0, 0), (0, 0), (0, pad)))
    s_pad = s + pad
    grid = (n, s_pad // ts)

    cost = pl.CostEstimate(
        flops=2 * n * c_out * c_in * s_pad,
        transcendentals=0,
        bytes_accessed=(x_flat.size + w2d.size + b.size) * itemsize
        + n * c_out * s_pad * jnp.dtype(out_dtype).itemsize,
    )

    out = pl.pallas_call(
        _pointwise_conv_kernel,
        out_shape=jax.ShapeDtypeStruct((n, c_out, s_pad), out_dtype),
        grid_spec=pltpu.PrefetchScalarGridSpec(
            num_scalar_prefetch=0,
            grid=grid,
            in_specs=[
                pl.BlockSpec((1, c_in, ts), lambda i, j: (i, 0, j)),
                pl.BlockSpec((c_out, c_in), lambda i, j: (0, 0)),
                pl.BlockSpec((c_out, 1), lambda i, j: (0, 0)),
            ],
            out_specs=pl.BlockSpec((1, c_out, ts), lambda i, j: (i, 0, j)),
        ),
        compiler_params=pltpu.CompilerParams(
            dimension_semantics=("parallel", "parallel"),
        ),
        cost_estimate=cost,
    )(x_flat, w2d, b.reshape(c_out, 1).astype(jnp.float32))

    if pad:
        out = out[:, :, :s]
    return out


def pre_vq_conv_forward(x, w, b, *, stride=1, padding=0, compute_dtype=None):
    """Forward of pre_vq_conv: Conv3d(ch_in, ch_out, k_size, stride, padding).

    x: (N, C_in, D, H, W);  w: (C_out, C_in, k, k, k);  b: (C_out,).
    compute_dtype: optionally cast x/w (e.g. bf16) for the matmul; accumulation stays f32.
    """
    n, c_in, d, h, wdim = x.shape
    c_out, _, kd, kh, kw = w.shape
    out_dtype = x.dtype
    if compute_dtype is not None:
        x = x.astype(compute_dtype)
        w = w.astype(compute_dtype)

    if (kd, kh, kw) == (1, 1, 1) and stride == 1 and padding == 0:
        # Hot path: 1x1x1 conv == channel matmul; no padding / patch extraction needed.
        s = d * h * wdim
        x_flat = x.reshape(n, c_in, s)
        out = _pointwise_conv(x_flat, w.reshape(c_out, c_in), b, out_dtype)
        return out.reshape(n, c_out, d, h, wdim)

    # General k_size / stride / padding: fold the k^3 taps into the channel dim (im2col)
    # and reuse the same MXU matmul kernel.
    # TODO(synk): fuse the patch extraction into the kernel via manual per-tap DMA so the
    # k^3-expanded input is never materialized in HBM.
    p = padding
    x_pad = jnp.pad(x, ((0, 0), (0, 0), (p, p), (p, p), (p, p)))
    do = (d + 2 * p - kd) // stride + 1
    ho = (h + 2 * p - kh) // stride + 1
    wo = (wdim + 2 * p - kw) // stride + 1
    patches = []
    for zd in range(kd):
        for zh in range(kh):
            for zw in range(kw):
                patches.append(
                    x_pad[:, :,
                          zd:zd + (do - 1) * stride + 1:stride,
                          zh:zh + (ho - 1) * stride + 1:stride,
                          zw:zw + (wo - 1) * stride + 1:stride])
    x_col = jnp.stack(patches, axis=2).reshape(n, c_in * kd * kh * kw, do * ho * wo)
    w2d = w.reshape(c_out, c_in * kd * kh * kw)
    out = _pointwise_conv(x_col, w2d, b, out_dtype)
    return out.reshape(n, c_out, do, ho, wo)


def pre_vq_conv_reference(x, w, b, *, stride=1, padding=0):
    """Pure-JAX reference mirroring nn.Conv3d(ch_in, ch_out, k, stride, padding)."""
    dn = lax.conv_dimension_numbers(x.shape, w.shape, ('NCDHW', 'OIDHW', 'NCDHW'))
    y = lax.conv_general_dilated(
        x, w, window_strides=(stride, stride, stride),
        padding=[(padding, padding)] * 3, dimension_numbers=dn)
    return y + b[None, :, None, None, None]


if __name__ == "__main__":
    key = jax.random.PRNGKey(0)
    k1, k2, k3, k4, k5, k6 = jax.random.split(key, 6)

    # Case 1: canonical pre_vq_conv config (1x1x1 conv): N=2, C_in=16 -> C_out=8, 8^3 volume.
    N, C_IN, C_OUT, D = 2, 16, 8, 8
    x = jax.random.normal(k1, (N, C_IN, D, D, D), dtype=jnp.float32)
    w = jax.random.normal(k2, (C_OUT, C_IN, 1, 1, 1), dtype=jnp.float32) * 0.1
    b = jax.random.normal(k3, (C_OUT,), dtype=jnp.float32) * 0.1

    out = jax.block_until_ready(pre_vq_conv_forward(x, w, b))
    ref = pre_vq_conv_reference(x, w, b)
    assert out.shape == ref.shape == (N, C_OUT, D, D, D)
    assert jnp.allclose(out, ref, atol=1e-4, rtol=1e-4), float(jnp.max(jnp.abs(out - ref)))

    # Case 2: general k_size path (k=3, stride=1, padding=1), exercises im2col + lane padding.
    C_IN2, C_OUT2, D2 = 4, 8, 6
    x2 = jax.random.normal(k4, (N, C_IN2, D2, D2, D2), dtype=jnp.float32)
    w2 = jax.random.normal(k5, (C_OUT2, C_IN2, 3, 3, 3), dtype=jnp.float32) * 0.1
    b2 = jax.random.normal(k6, (C_OUT2,), dtype=jnp.float32) * 0.1

    out2 = jax.block_until_ready(pre_vq_conv_forward(x2, w2, b2, stride=1, padding=1))
    ref2 = pre_vq_conv_reference(x2, w2, b2, stride=1, padding=1)
    assert out2.shape == ref2.shape == (N, C_OUT2, D2, D2, D2)
    assert jnp.allclose(out2, ref2, atol=1e-4, rtol=1e-4), float(jnp.max(jnp.abs(out2 - ref2)))

    print("KERNEL_OK")
</pallas_src>

<mosaic_0001>
module attributes {stable_mosaic.version = 11 : i64} {
  func.func @_pointwise_conv_kernel(%arg0: i32, %arg1: i32, %arg2: memref<1x16x512xf32, #tpu.memory_space<vmem>>, %arg3: memref<8x16xf32, #tpu.memory_space<vmem>>, %arg4: memref<8x1xf32, #tpu.memory_space<vmem>>, %arg5: memref<1x8x512xf32, #tpu.memory_space<vmem>>) attributes {dimension_semantics = [#tpu.dimension_semantics<parallel>, #tpu.dimension_semantics<parallel>], iteration_bounds = array<i64: 2, 1>, scalar_prefetch = 0 : i64, scratch_operands = 0 : i64, tpu.core_type = #tpu.core_type<tc>, window_params = [{transform_indices = @transform_0, window_bounds = array<i64: 1, 16, 512>}, {pipeline_mode = #tpu.pipeline_mode<synchronous>, transform_indices = @transform_1, window_bounds = array<i64: 8, 16>}, {pipeline_mode = #tpu.pipeline_mode<synchronous>, transform_indices = @transform_2, window_bounds = array<i64: 8, 1>}, {transform_indices = @transform_3, window_bounds = array<i64: 1, 8, 512>}]} {
    %c0 = arith.constant 0 : index
    %c0_0 = arith.constant 0 : index
    %0 = vector.load %arg3[%c0, %c0_0] : memref<8x16xf32, #tpu.memory_space<vmem>>, vector<8x16xf32>
    %c0_1 = arith.constant 0 : index
    %c0_2 = arith.constant 0 : index
    %c0_3 = arith.constant 0 : index
    %1 = vector.load %arg2[%c0_1, %c0_2, %c0_3] : memref<1x16x512xf32, #tpu.memory_space<vmem>>, vector<1x16x512xf32>
    %2 = vector.shape_cast %1 : vector<1x16x512xf32> to vector<16x512xf32>
    %cst = arith.constant dense<0.000000e+00> : vector<8x512xf32>
    %3 = tpu.matmul %0, %2, %cst {dimension_numbers = #tpu.dot_dimension_numbers<[1], [0], [0], [1], [0, 0, 1, 1], [], []>} : vector<8x16xf32>, vector<16x512xf32>, vector<8x512xf32> -> vector<8x512xf32>
    %c0_4 = arith.constant 0 : index
    %c0_5 = arith.constant 0 : index
    %4 = vector.load %arg4[%c0_4, %c0_5] : memref<8x1xf32, #tpu.memory_space<vmem>>, vector<8x1xf32>
    %5 = vector.broadcast %4 : vector<8x1xf32> to vector<8x512xf32>
    %6 = arith.addf %3, %5 : vector<8x512xf32>
    %c0_6 = arith.constant 0 : index
    %c0_7 = arith.constant 0 : index
    %c0_8 = arith.constant 0 : index
    %7 = vector.load %arg5[%c0_6, %c0_7, %c0_8] : memref<1x8x512xf32, #tpu.memory_space<vmem>>, vector<1x8x512xf32>
    %8 = vector.shape_cast %7 : vector<1x8x512xf32> to vector<8x512xf32>
    %9 = vector.shape_cast %6 : vector<8x512xf32> to vector<1x8x512xf32>
    tpu.vector_store %arg5[%c0_6, %c0_7, %c0_8], %9 {strides = array<i32>} : memref<1x8x512xf32, #tpu.memory_space<vmem>>, vector<1x8x512xf32>,
    return
  }
  func.func @transform_0(%arg0: i32, %arg1: i32) -> (i32, i32, i32) {
    %c0_i32 = arith.constant 0 : i32
    %c0_i32_0 = arith.constant 0 : i32
    return %arg0, %c0_i32, %arg1 : i32, i32, i32
  }
  func.func @transform_1(%arg0: i32, %arg1: i32) -> (i32, i32) {
    %c0_i32 = arith.constant 0 : i32
    %c0_i32_0 = arith.constant 0 : i32
    %c0_i32_1 = arith.constant 0 : i32
    return %c0_i32, %c0_i32_0 : i32, i32
  }
  func.func @transform_2(%arg0: i32, %arg1: i32) -> (i32, i32) {
    %c0_i32 = arith.constant 0 : i32
    %c0_i32_0 = arith.constant 0 : i32
    %c0_i32_1 = arith.constant 0 : i32
    return %c0_i32, %c0_i32_0 : i32, i32
  }
  func.func @transform_3(%arg0: i32, %arg1: i32) -> (i32, i32, i32) {
    %c0_i32 = arith.constant 0 : i32
    %c0_i32_0 = arith.constant 0 : i32
    return %arg0, %c0_i32, %arg1 : i32, i32, i32
  }
}

</mosaic_0001>

<llo_original>
// kernel: tpu_custom_call.1
$region0: #{tpu_custom_call.1}
  #allocation0 [shape = 'u32[]', space=smem, size = 0x4, offset = 0x4, fixed_abs, tag = 'smem constant byte address 0x4 - core index']
  #allocation1 [shape = 'u32[144,128]{1,0:T(1,128)}', space=vmem, size = 0x12000, scoped, tag = 'internal scratch']
  %s0 = inlined_call_operand.hbm [shape: f32[2,16,512], index: 0, kind: input, shape index: {}]
  %s1 = inlined_call_operand.vmem [shape: f32[8,16], index: 1, kind: input, shape index: {}]
  %s2 = inlined_call_operand.vmem [shape: f32[8,1], index: 2, kind: input, shape index: {}]
  %s3 = inlined_call_operand.hbm [shape: f32[2,8,512], index: 3, kind: output, shape index: {}]
  %s4 = sld [smem:[#allocation0]]
  $region49: #{tpu_custom_call.1} parent=0
    _
  %s6 = ssub.s32 1, %s4
  %s7 = scalar_select 0, %s6, %s4
  $region1: #{tpu_custom_call.1} parent=0
    #allocation2 [shape = 'u8[65536]{0}', space=vmem, size = 0x10000, scoped, tag = 'input window, operand 0']
    #allocation3 [shape = 's32[2]{0}', space=sflag, size = 0x8, scoped, tag = 'scoped memory for tpu_custom_call.1']
    #allocation4 [shape = 's32[2]{0}', space=sflag, size = 0x8, scoped, tag = 'scoped memory for tpu_custom_call.1']
    #allocation5 [shape = 'u8[32768]{0}', space=vmem, size = 0x8000, scoped, tag = 'output window, operand 0']
    %8 = vsyncpa [#allocation3], 0
    %s9 = scalar_lea.sflag [#allocation3], 1
    %10 = vsyncpa %s9, 0
    %11 = vsyncpa [#allocation4], 0
    %s12 = scalar_lea.sflag [#allocation4], 1
    %13 = vsyncpa %s12, 0
    loop: start=0, step=1, limit=4
    $region2: #{tpu_custom_call.1} parent=1 // loop_pre_header
      _
    $region3: #{tpu_custom_call.1} parent=1 // loop_header
      %s15 = sphi 0, %s19
      %p16 = scmp.ge.s32.totalorder %s15, 4
      %s22 = sphi 0, %s34
      %s23 = sphi 0, %s30
      %s24 = sphi 0, %s22
      %s25 = sphi 0, %s23
      %s26 = sphi 0, %s24
      %s27 = sphi 0, %s25
      %s39 = sphi 0, %s41
      %s42 = sphi 0, %s39
      %s43 = sphi 0, %s42
      %s59 = sphi 0, %s43
      %s63 = sphi 0, %s63
      %s65 = sphi 0, %s63
      %s66 = sphi 0, %s65
      %s80 = sphi 0, %s66
      %s84 = sphi 0, %s84
      %s86 = sphi 0, %s84
      %s87 = sphi 0, %s86
      %s101 = sphi 0, %s87
      %s109 = sphi 0, %s111
      %s112 = sphi 0, %s109
      %s113 = sphi 0, %s112
      %s129 = sphi 0, %s113
    $region4: #{tpu_custom_call.1} parent=1 // loop_header_branch
      %18 = sbr.rel (%p16) target = $region8
    $region5: #{tpu_custom_call.1} parent=1 // loop_body
      %s20 = ssub.s32 %s15, 1
      %s21 = ssub.s32 %s15, 2
      %s28 = sadd.s32 1, %s23
      %p29 = scmp.ge.s32.totalorder %s28, 1
      %s30 = scalar_select %p29, 0, %s28
      %s31 = sadd.s32 1, %s22
      %s32 = scalar_select %p29, %s31, %s22
      %p33 = scmp.ge.s32.totalorder %s32, 2
      %s34 = scalar_select %p33, 0, %s32
      %s35 = ssub.s32 %s22, %s34
      %s36 = ssub.s32 %s23, %s30
      %s37 = sor.u32 %s35, %s36
      %p38 = scmp.eq.s32.totalorder %s37, 0
      %s40 = sadd.s32 %s39, 1
      %s41 = scalar_select %p38, %s39, %s40
      %p44 = pneg %p38
      %p45 = scmp.eq.s32.totalorder %s15, 1
      %p46 = por %p44, %p45
      %p47 = scmp.ne.s32.totalorder %s39, %s42
      %p48 = scmp.eq.s32.totalorder %s15, 0
      %p49 = por %p47, %p48
      %p50 = scmp.ne.s32.totalorder %s39, %s42
      %p51 = scmp.eq.s32.totalorder %s20, 1
      %p52 = por %p50, %p51
      %p53 = scmp.ne.s32.totalorder %s42, %s43
      %p54 = scmp.eq.s32.totalorder %s20, 0
      %p55 = por %p53, %p54
      %p56 = scmp.ne.s32.totalorder %s42, %s43
      %p57 = scmp.eq.s32.totalorder %s21, 1
      %p58 = por %p56, %p57
      %p60 = scmp.ne.s32.totalorder %s43, %s59
      %p61 = scmp.eq.s32.totalorder %s21, 0
      %p62 = por %p60, %p61
      %s64 = sadd.s32 %s63, 1
      %p67 = scmp.eq.s32.totalorder %s15, 1
      %p68 = scmp.ne.s32.totalorder %s63, %s65
      %p69 = scmp.eq.s32.totalorder %s15, 0
      %p70 = por %p68, %p69
      %p71 = scmp.ne.s32.totalorder %s63, %s65
      %p72 = scmp.eq.s32.totalorder %s20, 1
      %p73 = por %p71, %p72
      %p74 = scmp.ne.s32.totalorder %s65, %s66
      %p75 = scmp.eq.s32.totalorder %s20, 0
      %p76 = por %p74, %p75
      %p77 = scmp.ne.s32.totalorder %s65, %s66
      %p78 = scmp.eq.s32.totalorder %s21, 1
      %p79 = por %p77, %p78
      %p81 = scmp.ne.s32.totalorder %s66, %s80
      %p82 = scmp.eq.s32.totalorder %s21, 0
      %p83 = por %p81, %p82
      %s85 = sadd.s32 %s84, 1
      %p88 = scmp.eq.s32.totalorder %s15, 1
      %p89 = scmp.ne.s32.totalorder %s84, %s86
      %p90 = scmp.eq.s32.totalorder %s15, 0
      %p91 = por %p89, %p90
      %p92 = scmp.ne.s32.totalorder %s84, %s86
      %p93 = scmp.eq.s32.totalorder %s20, 1
      %p94 = por %p92, %p93
      %p95 = scmp.ne.s32.totalorder %s86, %s87
      %p96 = scmp.eq.s32.totalorder %s20, 0
      %p97 = por %p95, %p96
      %p98 = scmp.ne.s32.totalorder %s86, %s87
      %p99 = scmp.eq.s32.totalorder %s21, 1
      %p100 = por %p98, %p99
      %p102 = scmp.ne.s32.totalorder %s87, %s101
      %p103 = scmp.eq.s32.totalorder %s21, 0
      %p104 = por %p102, %p103
      %s105 = ssub.s32 %s22, %s34
      %s106 = ssub.s32 %s23, %s30
      %s107 = sor.u32 %s105, %s106
      %p108 = scmp.eq.s32.totalorder %s107, 0
      %s110 = sadd.s32 %s109, 1
      %s111 = scalar_select %p108, %s109, %s110
      %p114 = pneg %p108
      %p115 = scmp.eq.s32.totalorder %s15, 1
      %p116 = por %p114, %p115
      %p117 = scmp.ne.s32.totalorder %s109, %s112
      %p118 = scmp.eq.s32.totalorder %s15, 0
      %p119 = por %p117, %p118
      %p120 = scmp.ne.s32.totalorder %s109, %s112
      %p121 = scmp.eq.s32.totalorder %s20, 1
      %p122 = por %p120, %p121
      %p123 = scmp.ne.s32.totalorder %s112, %s113
      %p124 = scmp.eq.s32.totalorder %s20, 0
      %p125 = por %p123, %p124
      %p126 = scmp.ne.s32.totalorder %s112, %s113
      %p127 = scmp.eq.s32.totalorder %s21, 1
      %p128 = por %p126, %p127
      %p130 = scmp.ne.s32.totalorder %s113, %s129
      %p131 = scmp.eq.s32.totalorder %s21, 0
      %p132 = por %p130, %p131
      %p133 = scmp.le.s32.totalorder 1, %s15
      %p134 = scmp.lt.s32.totalorder %s15, 3
      %p135 = pnand %p133, %p134
      %p136 = pneg %p135
      // Predicated region
      $region9: #{tpu_custom_call.1} parent=5 // pred_check
        _
      $region10: #{tpu_custom_call.1} parent=5 // pred_check_branch
        %138 = sbr.rel (%p135) target = $region12
      $region11: #{tpu_custom_call.1} parent=5 // pred_region
        %s139 = ssub.s32 %s15, 1
        // Predicated region
        $region13: #{tpu_custom_call.1} parent=11 // pred_check
          %p140 = pneg %p76
        $region14: #{tpu_custom_call.1} parent=11 // pred_check_branch
          %142 = sbr.rel (%p140) target = $region16
        $region15: #{tpu_custom_call.1} parent=11 // pred_region
          _
        $region16: #{tpu_custom_call.1} parent=11 // pred_fallthru
          _
        // Predicated region
        $region17: #{tpu_custom_call.1} parent=11 // pred_check
          %p143 = pneg %p97
        $region18: #{tpu_custom_call.1} parent=11 // pred_check_branch
          %145 = sbr.rel (%p143) target = $region20
        $region19: #{tpu_custom_call.1} parent=11 // pred_region
          _
        $region20: #{tpu_custom_call.1} parent=11 // pred_fallthru
          _
      $region12: #{tpu_custom_call.1} parent=5 // pred_fallthru
        _
      %p146 = scmp.lt.s32.totalorder %s15, 2
      // Predicated region
      $region21: #{tpu_custom_call.1} parent=5 // pred_check
        %p147 = pneg %p146
      $region22: #{tpu_custom_call.1} parent=5 // pred_check_branch
        %149 = sbr.rel (%p147) target = $region24
      $region23: #{tpu_custom_call.1} parent=5 // pred_region
        // Predicated region
        $region25: #{tpu_custom_call.1} parent=23 // pred_check
          %p150 = pneg %p49
        $region26: #{tpu_custom_call.1} parent=23 // pred_check_branch
          %152 = sbr.rel (%p150) target = $region28
        $region27: #{tpu_custom_call.1} parent=23 // pred_region
          %s153 = sand.u32 %s39, 1
          %s154 = scalar_lea.sflag [#allocation3], %s153
          %s155 = sand.u32 %s39, 1
          %s156 = smul.addr %s155, 64
          %s157 = scalar_lea.vmem [#allocation2], %s156
          %s158 = smul.u32 4, %s23
          %s160 = ssub.s32 1024, 1024
          %161 = vsyncadd %s154, %s160
          %s162 = smul.addr %s22, 8
          %s163 = sadd.s32 %s158, %s162
          %s164 = smul.addr %s163, 128
          %s165 = scalar_lea.hbm %s0, %s164
          %s166 = sshll.u32 %s157, 4
          %s167 = int_to_ptr.vmem [resolvable:$true] %s166
          %172 = dma.hbm_to_vmem [thread:$0]  %s165, 1024, %s167, %s154, 512, 512, 32
        $region28: #{tpu_custom_call.1} parent=23 // pred_fallthru
          _
      $region24: #{tpu_custom_call.1} parent=5 // pred_fallthru
        _
      %p173 = scmp.le.s32.totalorder 1, %s15
      %p174 = scmp.lt.s32.totalorder %s15, 3
      %p175 = pnand %p173, %p174
      %p176 = pneg %p175
      // Predicated region
      $region29: #{tpu_custom_call.1} parent=5 // pred_check
        _
      $region30: #{tpu_custom_call.1} parent=5 // pred_check_branch
        %178 = sbr.rel (%p175) target = $region32
      $region31: #{tpu_custom_call.1} parent=5 // pred_region
        %s179 = ssub.s32 %s15, 1
        %s180 = sand.u32 %s42, 1
        %s181 = scalar_lea.sflag [#allocation3], %s180
        %s182 = sand.u32 %s42, 1
        %s183 = smul.addr %s182, 64
        %s184 = scalar_lea.vmem [#allocation2], %s183
        // Predicated region
        $region33: #{tpu_custom_call.1} parent=31 // pred_check
          %p185 = pneg %p55
        $region34: #{tpu_custom_call.1} parent=31 // pred_check_branch
          %187 = sbr.rel (%p185) target = $region36
        $region35: #{tpu_custom_call.1} parent=31 // pred_region
          %188 = dma.done %s181, 1024
        $region36: #{tpu_custom_call.1} parent=31 // pred_fallthru
          _
        %s189 = sand.u32 %s42, 1
        %s190 = scalar_lea.sflag [#allocation3], %s189
        %s191 = sand.u32 %s42, 1
        %s192 = smul.addr %s191, 64
        %s193 = scalar_lea.vmem [#allocation2], %s192
        %p194 = pneg %p55
        %p195 = pneg %p52
        %p196 = pneg %p76
        %p197 = pneg %p73
        %p198 = pneg %p97
        %p199 = pneg %p94
        %p200 = pneg %p125
        %p201 = pneg %p122
        %s202 = sand.u32 %s112, 1
        %s203 = scalar_lea.sflag [#allocation4], %s202
        %s204 = sand.u32 %s112, 1
        %s205 = smul.addr %s204, 32
        %s206 = scalar_lea.vmem [#allocation5], %s205
        %s207 = smul.u32 4, %s25
        %s208 = smul.u32 4, %s25
        %v209 = vld [vmem:[%s1] sm:$0xff]
        %v210 = vld [vmem:[%s184] sm:$0xff]
        %v211 = vld [vmem:[%s184 + $0x8] sm:$0xff]
        %v212 = vld [vmem:[%s184 + $0x10] sm:$0xff]
        %v213 = vld [vmem:[%s184 + $0x18] sm:$0xff]
        %v214 = vld [vmem:[%s184 + $0x20] sm:$0xff]
        %v215 = vld [vmem:[%s184 + $0x28] sm:$0xff]
        %v216 = vld [vmem:[%s184 + $0x30] sm:$0xff]
        %v217 = vld [vmem:[%s184 + $0x38] sm:$0xff]
        %v218 = vld [vmem:[%s2] sm:$0xff]
        %220 = vset.pattern.permute.xlu0 0
        %221 = vperm.xlu0 %220, %v218
        %v222 = vpop.permute.xlu0 %221
        %vm224 = vcmask 130048
        %v226 = vsel %vm224, %v209, 0
        %228 = vmatprep.subr.mxu0 0.0
        %229 = vmatpush1.msra.mxu0 0.0
        %230 = vmatprep.subr.mxu0 0.0
        %231 = vmatpush1.msra.mxu0 0.0
        %232 = vmatprep.subr.mxu0 0.0
        %233 = vmatpush1.msra.mxu0 0.0
        %234 = vmatprep.subr.mxu0 0.0
        %235 = vmatpush1.msra.mxu0 0.0
        %236 = vmatprep.subr.mxu0 0.0
        %237 = vmatpush1.msra.mxu0 0.0
        %238 = vmatprep.subr.mxu0 0.0
        %239 = vmatpush1.msra.mxu0 0.0
        %240 = vmatprep.subr.mxu0 0.0
        %241 = vmatpush1.msra.mxu0 0.0
        %242 = vmatprep.subr.mxu0 0.0
        %243 = vmatpush1.msra.mxu0 0.0
        %244 = vmatprep.subr.mxu0 0.0
        %245 = vmatpush1.msra.mxu0 0.0
        %246 = vmatprep.subr.mxu0 0.0
        %247 = vmatpush1.msra.mxu0 0.0
        %248 = vmatprep.subr.mxu0 0.0
        %249 = vmatpush1.msra.mxu0 0.0
        %250 = vmatprep.subr.mxu0 0.0
        %251 = vmatpush1.msra.mxu0 0.0
        %252 = vmatprep.subr.mxu0 0.0
        %253 = vmatpush1.msra.mxu0 0.0
        %254 = vmatprep.subr.mxu0 0.0
        %255 = vmatpush1.msra.mxu0 0.0
        %256 = vmatprep.subr.mxu0 %v215
        %257 = vmatpush1.msra.mxu0 %v214
        %258 = vmatprep.subr.mxu0 %v211
        %259 = vmatpush1.msra.mxu0 %v210
        %260 = vmatprep.subr.mxu0 0.0
        %261 = vmatpush2.msra.mxu0 0.0
        %262 = vmatprep.subr.mxu0 0.0
        %263 = vmatpush2.msra.mxu0 0.0
        %264 = vmatprep.subr.mxu0 0.0
        %265 = vmatpush2.msra.mxu0 0.0
        %266 = vmatprep.subr.mxu0 0.0
        %267 = vmatpush2.msra.mxu0 0.0
        %268 = vmatprep.subr.mxu0 0.0
        %269 = vmatpush2.msra.mxu0 0.0
        %270 = vmatprep.subr.mxu0 0.0
        %271 = vmatpush2.msra.mxu0 0.0
        %272 = vmatprep.subr.mxu0 0.0
        %273 = vmatpush2.msra.mxu0 0.0
        %274 = vmatprep.subr.mxu0 0.0
        %275 = vmatpush2.msra.mxu0 0.0
        %276 = vmatprep.subr.mxu0 0.0
        %277 = vmatpush2.msra.mxu0 0.0
        %278 = vmatprep.subr.mxu0 0.0
        %279 = vmatpush2.msra.mxu0 0.0
        %280 = vmatprep.subr.mxu0 0.0
        %281 = vmatpush2.msra.mxu0 0.0
        %282 = vmatprep.subr.mxu0 0.0
        %283 = vmatpush2.msra.mxu0 0.0
        %284 = vmatprep.subr.mxu0 0.0
        %285 = vmatpush2.msra.mxu0 0.0
        %286 = vmatprep.subr.mxu0 0.0
        %287 = vmatpush2.msra.mxu0 0.0
        %288 = vmatprep.subr.mxu0 0.0
        %289 = vmatpush2.msra.mxu0 0.0
        %290 = vmatprep.subr.mxu0 0.0
        %291 = vmatpush2.msra.mxu0 0.0
        %292 = vmatprep.mubr.f32.mxu0 0.0
        %293 = vmatmul.mubr.f32.gmra.mxu0 %v226
        %v294 = vpop.f32.mrf.mxu0
        %v295 = vadd.f32 %v222, %v294
        %v296 = vpop.f32.mrf.mxu0
        %v297 = vadd.f32 %v222, %v296
        %298 = vdwg.mxu0
        %299 = vmatprep.subr.mxu0 0.0
        %300 = vmatpush1.msra.mxu0 0.0
        %301 = vmatprep.subr.mxu0 0.0
        %302 = vmatpush1.msra.mxu0 0.0
        %303 = vmatprep.subr.mxu0 0.0
        %304 = vmatpush1.msra.mxu0 0.0
        %305 = vmatprep.subr.mxu0 0.0
        %306 = vmatpush1.msra.mxu0 0.0
        %307 = vmatprep.subr.mxu0 0.0
        %308 = vmatpush1.msra.mxu0 0.0
        %309 = vmatprep.subr.mxu0 0.0
        %310 = vmatpush1.msra.mxu0 0.0
        %311 = vmatprep.subr.mxu0 0.0
        %312 = vmatpush1.msra.mxu0 0.0
        %313 = vmatprep.subr.mxu0 0.0
        %314 = vmatpush1.msra.mxu0 0.0
        %315 = vmatprep.subr.mxu0 0.0
        %316 = vmatpush1.msra.mxu0 0.0
        %317 = vmatprep.subr.mxu0 0.0
        %318 = vmatpush1.msra.mxu0 0.0
        %319 = vmatprep.subr.mxu0 0.0
        %320 = vmatpush1.msra.mxu0 0.0
        %321 = vmatprep.subr.mxu0 0.0
        %322 = vmatpush1.msra.mxu0 0.0
        %323 = vmatprep.subr.mxu0 0.0
        %324 = vmatpush1.msra.mxu0 0.0
        %325 = vmatprep.subr.mxu0 0.0
        %326 = vmatpush1.msra.mxu0 0.0
        %327 = vmatprep.subr.mxu0 %v217
        %328 = vmatpush1.msra.mxu0 %v216
        %329 = vmatprep.subr.mxu0 %v213
        %330 = vmatpush1.msra.mxu0 %v212
        %331 = vmatprep.subr.mxu0 0.0
        %332 = vmatpush2.msra.mxu0 0.0
        %333 = vmatprep.subr.mxu0 0.0
        %334 = vmatpush2.msra.mxu0 0.0
        %335 = vmatprep.subr.mxu0 0.0
        %336 = vmatpush2.msra.mxu0 0.0
        %337 = vmatprep.subr.mxu0 0.0
        %338 = vmatpush2.msra.mxu0 0.0
        %339 = vmatprep.subr.mxu0 0.0
        %340 = vmatpush2.msra.mxu0 0.0
        %341 = vmatprep.subr.mxu0 0.0
        %342 = vmatpush2.msra.mxu0 0.0
        %343 = vmatprep.subr.mxu0 0.0
        %344 = vmatpush2.msra.mxu0 0.0
        %345 = vmatprep.subr.mxu0 0.0
        %346 = vmatpush2.msra.mxu0 0.0
        %347 = vmatprep.subr.mxu0 0.0
        %348 = vmatpush2.msra.mxu0 0.0
        %349 = vmatprep.subr.mxu0 0.0
        %350 = vmatpush2.msra.mxu0 0.0
        %351 = vmatprep.subr.mxu0 0.0
        %352 = vmatpush2.msra.mxu0 0.0
        %353 = vmatprep.subr.mxu0 0.0
        %354 = vmatpush2.msra.mxu0 0.0
        %355 = vmatprep.subr.mxu0 0.0
        %356 = vmatpush2.msra.mxu0 0.0
        %357 = vmatprep.subr.mxu0 0.0
        %358 = vmatpush2.msra.mxu0 0.0
        %359 = vmatprep.subr.mxu0 0.0
        %360 = vmatpush2.msra.mxu0 0.0
        %361 = vmatprep.subr.mxu0 0.0
        %362 = vmatpush2.msra.mxu0 0.0
        %363 = vmatprep.mubr.f32.mxu0 0.0
        %364 = vmatmul.mubr.f32.gmra.mxu0 %v226
        %v365 = vpop.f32.mrf.mxu0
        %v366 = vadd.f32 %v222, %v365
        %v367 = vpop.f32.mrf.mxu0
        %v368 = vadd.f32 %v222, %v367
        %369 = vdwg.mxu0
        %370 = vst [vmem:[%s206] sm:$0xff] %v295
        %371 = vst [vmem:[%s206 + $0x8] sm:$0xff] %v297
        %372 = vst [vmem:[%s206 + $0x10] sm:$0xff] %v366
        %373 = vst [vmem:[%s206 + $0x18] sm:$0xff] %v368
        %s374 = sand.u32 %s112, 1
        %s375 = scalar_lea.sflag [#allocation4], %s374
        %s376 = sand.u32 %s112, 1
        %s377 = smul.addr %s376, 32
        %s378 = scalar_lea.vmem [#allocation5], %s377
        // Predicated region
        $region37: #{tpu_custom_call.1} parent=31 // pred_check
          %p379 = pneg %p122
        $region38: #{tpu_custom_call.1} parent=31 // pred_check_branch
          %381 = sbr.rel (%p379) target = $region40
        $region39: #{tpu_custom_call.1} parent=31 // pred_region
          %s382 = smul.u32 4, %s25
          %s384 = ssub.s32 512, 512
          %385 = vsyncadd %s375, %s384
          %s386 = smul.addr %s24, 4
          %s387 = sadd.s32 %s382, %s386
          %s388 = smul.addr %s387, 128
          %s389 = scalar_lea.hbm %s3, %s388
          %s391 = sshll.u32 %s378, 4
          %s392 = int_to_ptr.vmem [resolvable:$true] %s391
          %394 = dma.vmem_to_hbm [thread:$0]  %s392, 512, %s389, %s375
        $region40: #{tpu_custom_call.1} parent=31 // pred_fallthru
          _
      $region32: #{tpu_custom_call.1} parent=5 // pred_fallthru
        _
      %p395 = scmp.le.s32.totalorder 2, %s15
      // Predicated region
      $region41: #{tpu_custom_call.1} parent=5 // pred_check
        %p396 = pneg %p395
      $region42: #{tpu_custom_call.1} parent=5 // pred_check_branch
        %398 = sbr.rel (%p396) target = $region44
      $region43: #{tpu_custom_call.1} parent=5 // pred_region
        %s399 = ssub.s32 %s15, 2
        // Predicated region
        $region45: #{tpu_custom_call.1} parent=43 // pred_check
          %p400 = pneg %p128
        $region46: #{tpu_custom_call.1} parent=43 // pred_check_branch
          %402 = sbr.rel (%p400) target = $region48
        $region47: #{tpu_custom_call.1} parent=43 // pred_region
          %s403 = sand.u32 %s113, 1
          %s404 = scalar_lea.sflag [#allocation4], %s403
          %s405 = sand.u32 %s113, 1
          %s406 = smul.addr %s405, 32
          %s407 = scalar_lea.vmem [#allocation5], %s406
          %408 = dma.done %s404, 512
        $region48: #{tpu_custom_call.1} parent=43 // pred_fallthru
          _
      $region44: #{tpu_custom_call.1} parent=5 // pred_fallthru
        _
    $region6: #{tpu_custom_call.1} parent=1 // loop_footer
      %s19 = sadd.s32 1, %s15
    $region7: #{tpu_custom_call.1} parent=1 // loop_footer_branch
      %14 = sbr.rel target = $region3
    $region8: #{tpu_custom_call.1} parent=1 // loop_exit
      _
    %409 = vsyncpa [#allocation3], 1
    %s410 = scalar_lea.sflag [#allocation3], 1
    %411 = vsyncpa %s410, 1
    %412 = vsyncpa [#allocation4], 1
    %s413 = scalar_lea.sflag [#allocation4], 1
    %414 = vsyncpa %s413, 1

</llo_original>
